<compile_context>
chip_gen: v6e
topology: v6e:2x2x1
jax: 0.10.0
libtpu: 0.0.40
codegen_flags: <defaults>
</compile_context>

<pallas_src>
import jax
import jax.numpy as jnp
from jax.experimental import pallas as pl
from jax.experimental.pallas import tpu as pltpu

LANES = 128  # W/b out_features padded to this so the MXU/VPU tiles are lane-dense


def linear_kernel(x_ref, w_ref, b_ref, o_ref):
    # x_ref: (bb, K)      -- one batch tile (K == full in_features)
    # w_ref: (K, 128)     -- grid-invariant, zero-padded columns
    # b_ref: (1, 128)     -- grid-invariant, zero-padded columns
    # o_ref: (bb, N)      -- true (unpadded) output width
    n = o_ref.shape[-1]
    acc = jnp.dot(x_ref[...], w_ref[...], preferred_element_type=jnp.float32)
    o_ref[...] = (acc[:, :n] + b_ref[:, :n]).astype(o_ref.dtype)


def prepare_params(w, b):
    """Pad weight/bias out_features to 128 lanes ONCE at parameter-setup time.

    w: (K, N) in [in, out] layout, b: (N,) or (1, N).  Returns (w_p, b_p, N).
    """
    K, N = w.shape
    b2 = b.reshape(1, -1)
    w_p = jnp.pad(w, ((0, 0), (0, LANES - N)))   # (K, 128)
    b_p = jnp.pad(b2, ((0, 0), (0, LANES - N)))  # (1, 128)
    return w_p, b_p, N


def _round_up(v, m):
    return ((v + m - 1) // m) * m


def simple_llm_forward(x, w_p, b_p, n_out, *, block_b=1024, min_pallas_batch=4096):
    """y = x @ W + b with W/b pre-padded by prepare_params.

    x: (B, K) f32, w_p: (K, 128) f32, b_p: (1, 128) f32  ->  (B, n_out) f32.
    """
    B, K = x.shape
    N = n_out

    # Small-batch fallback: custom-call launch + pipeline prologue dominate,
    # XLA's fused GEMM is faster and simpler there.
    if B < min_pallas_batch:
        return x @ w_p[:, :N] + b_p[:, :N]

    # Batch tile: multiple of 8 sublanes, >= 4 grid steps when possible (so the
    # "parallel" axis can split across v7x's two TensorCores), capped at 4096
    # rows (VMEM budget on the 64 MiB chip with double-buffered x/out tiles).
    bb = min(block_b, 4096, max(8, _round_up(pl.cdiv(B, 4), 8)))
    b_padded = pl.cdiv(B, bb) * bb
    x_p = x if b_padded == B else jnp.pad(x, ((0, b_padded - B), (0, 0)))
    grid = (b_padded // bb,)

    cost = pl.CostEstimate(
        flops=2 * B * K * N,
        transcendentals=0,
        bytes_accessed=4 * (B * K + K * LANES + LANES + B * N),
    )

    out = pl.pallas_call(
        linear_kernel,
        out_shape=jax.ShapeDtypeStruct((b_padded, N), x.dtype),
        grid=grid,
        in_specs=[
            # x tile streams over the batch grid axis; K == full array dim.
            pl.BlockSpec((bb, K), lambda i: (i, 0)),
            # W and b are grid-invariant -> loaded once, resident in VMEM.
            pl.BlockSpec((K, LANES), lambda i: (0, 0)),
            pl.BlockSpec((1, LANES), lambda i: (0, 0)),
        ],
        # Output keeps its true N width (last block dim == full array dim is
        # legal): no padded HBM writes and no materialized slice pass.
        out_specs=pl.BlockSpec((bb, N), lambda i: (i, 0)),
        compiler_params=pltpu.CompilerParams(
            dimension_semantics=("parallel",),
        ),
        cost_estimate=cost,
    )(x_p, w_p, b_p)

    # Only padded batch rows (if any) need slicing away.
    return out if b_padded == B else out[:B]


if __name__ == "__main__":
    key = jax.random.PRNGKey(0)
    k_x, k_w, k_b = jax.random.split(key, 3)

    in_features, out_features = 10, 10
    batch = 8

    # Deterministic parameter init mimicking torch.nn.Linear's uniform init
    # (U(-1/sqrt(fan_in), 1/sqrt(fan_in))).
    bound = 1.0 / jnp.sqrt(jnp.float32(in_features))
    # torch stores weight as (out, in); keep the transposed (in, out) layout.
    w_torch = jax.random.uniform(
        k_w, (out_features, in_features), jnp.float32, -bound, bound
    )
    w = w_torch.T                                        # (in, out)
    b = jax.random.uniform(k_b, (out_features,), jnp.float32, -bound, bound)

    x = jax.random.normal(k_x, (batch, in_features), jnp.float32)

    # One-time parameter prep (padding hoisted out of the forward path).
    w_p, b_p, n_out = prepare_params(w, b)

    # Force the Pallas path (min_pallas_batch=0) so the kernel is exercised
    # even at this small test batch.
    out = simple_llm_forward(x, w_p, b_p, n_out, min_pallas_batch=0)
    out = jax.block_until_ready(out)

    # Reference check against plain JAX (same math as torch's Linear).
    ref = x @ w + b.reshape(1, -1)
    assert out.shape == (batch, out_features)
    assert jnp.allclose(out, ref, atol=1e-5, rtol=1e-5)

    # Also sanity-check the plain-JAX small-batch fallback path.
    out_fb = jax.block_until_ready(simple_llm_forward(x, w_p, b_p, n_out))
    assert jnp.allclose(out_fb, ref, atol=1e-5, rtol=1e-5)

    print("KERNEL_OK")
</pallas_src>

<mosaic_0001>
module attributes {stable_mosaic.version = 11 : i64} {
  func.func @linear_kernel(%arg0: i32, %arg1: memref<8x10xf32, #tpu.memory_space<vmem>>, %arg2: memref<10x128xf32, #tpu.memory_space<vmem>>, %arg3: memref<1x128xf32, #tpu.memory_space<vmem>>, %arg4: memref<8x10xf32, #tpu.memory_space<vmem>>) attributes {dimension_semantics = [#tpu.dimension_semantics<parallel>], iteration_bounds = array<i64: 1>, scalar_prefetch = 0 : i64, scratch_operands = 0 : i64, tpu.core_type = #tpu.core_type<tc>, window_params = [{transform_indices = @transform_0, window_bounds = array<i64: 8, 10>}, {pipeline_mode = #tpu.pipeline_mode<synchronous>, transform_indices = @transform_1, window_bounds = array<i64: 10, 128>}, {pipeline_mode = #tpu.pipeline_mode<synchronous>, transform_indices = @transform_2, window_bounds = array<i64: 1, 128>}, {transform_indices = @transform_3, window_bounds = array<i64: 8, 10>}]} {
    %c0 = arith.constant 0 : index
    %c0_0 = arith.constant 0 : index
    %0 = vector.load %arg1[%c0, %c0_0] : memref<8x10xf32, #tpu.memory_space<vmem>>, vector<8x10xf32>
    %c0_1 = arith.constant 0 : index
    %c0_2 = arith.constant 0 : index
    %1 = vector.load %arg2[%c0_1, %c0_2] : memref<10x128xf32, #tpu.memory_space<vmem>>, vector<10x128xf32>
    %cst = arith.constant dense<0.000000e+00> : vector<8x128xf32>
    %2 = tpu.matmul %0, %1, %cst {dimension_numbers = #tpu.dot_dimension_numbers<[1], [0], [0], [1], [0, 0, 1, 1], [], []>} : vector<8x10xf32>, vector<10x128xf32>, vector<8x128xf32> -> vector<8x128xf32>
    %3 = vector.extract_strided_slice %2 {offsets = [0, 0], sizes = [8, 10], strides = [1, 1]} : vector<8x128xf32> to vector<8x10xf32>
    %c0_3 = arith.constant 0 : index
    %c0_4 = arith.constant 0 : index
    %4 = vector.load %arg3[%c0_3, %c0_4] : memref<1x128xf32, #tpu.memory_space<vmem>>, vector<1x10xf32>
    %5 = vector.broadcast %4 : vector<1x10xf32> to vector<8x10xf32>
    %6 = arith.addf %3, %5 : vector<8x10xf32>
    %c0_5 = arith.constant 0 : index
    %c0_6 = arith.constant 0 : index
    %7 = vector.load %arg4[%c0_5, %c0_6] : memref<8x10xf32, #tpu.memory_space<vmem>>, vector<8x10xf32>
    tpu.vector_store %arg4[%c0_5, %c0_6], %6 {strides = array<i32>} : memref<8x10xf32, #tpu.memory_space<vmem>>, vector<8x10xf32>,
    return
  }
  func.func @transform_0(%arg0: i32) -> (i32, i32) {
    %c0_i32 = arith.constant 0 : i32
    %c0_i32_0 = arith.constant 0 : i32
    return %arg0, %c0_i32 : i32, i32
  }
  func.func @transform_1(%arg0: i32) -> (i32, i32) {
    %c0_i32 = arith.constant 0 : i32
    %c0_i32_0 = arith.constant 0 : i32
    %c0_i32_1 = arith.constant 0 : i32
    return %c0_i32, %c0_i32_0 : i32, i32
  }
  func.func @transform_2(%arg0: i32) -> (i32, i32) {
    %c0_i32 = arith.constant 0 : i32
    %c0_i32_0 = arith.constant 0 : i32
    %c0_i32_1 = arith.constant 0 : i32
    return %c0_i32, %c0_i32_0 : i32, i32
  }
  func.func @transform_3(%arg0: i32) -> (i32, i32) {
    %c0_i32 = arith.constant 0 : i32
    %c0_i32_0 = arith.constant 0 : i32
    return %arg0, %c0_i32 : i32, i32
  }
}

</mosaic_0001>

<llo_original>
// kernel: tpu_custom_call.1
$region0: #{tpu_custom_call.1}
  #allocation0 [shape = 'u32[]', space=smem, size = 0x4, offset = 0x4, fixed_abs, tag = 'smem constant byte address 0x4 - core index']
  #allocation1 [shape = 'u32[144,128]{1,0:T(1,128)}', space=vmem, size = 0x12000, scoped, tag = 'internal scratch']
  %s0 = inlined_call_operand.hbm [shape: f32[8,10], index: 0, kind: input, shape index: {}]
  %s1 = inlined_call_operand.hbm [shape: f32[10,128], index: 1, kind: input, shape index: {}]
  %s2 = inlined_call_operand.vmem [shape: f32[1,128], index: 2, kind: input, shape index: {}]
  %s3 = inlined_call_operand.hbm [shape: f32[8,10], index: 3, kind: output, shape index: {}]
  %s4 = sld [smem:[#allocation0]]
  $region30: #{tpu_custom_call.1} parent=0
    _
  %s6 = ssub.s32 1, %s4
  %s7 = scalar_select 0, %s6, %s4
  $region1: #{tpu_custom_call.1} parent=0
    #allocation2 [shape = 'u8[4096]{0}', space=vmem, size = 0x1000, scoped, tag = 'input window, operand 0, single buffered']
    #allocation3 [shape = 's32[1]{0}', space=sflag, size = 0x4, scoped, tag = 'scoped memory for tpu_custom_call.1']
    #allocation4 [shape = 's32[1]{0}', space=sflag, size = 0x4, scoped, tag = 'scoped memory for tpu_custom_call.1']
    #allocation5 [shape = 'u8[8192]{0}', space=vmem, size = 0x2000, scoped, tag = 'input window, operand 1, single buffered']
    #allocation6 [shape = 's32[1]{0}', space=sflag, size = 0x4, scoped, tag = 'scoped memory for tpu_custom_call.1']
    #allocation7 [shape = 'u8[4096]{0}', space=vmem, size = 0x1000, scoped, tag = 'output window, operand 0, single buffered']
    %8 = vsyncpa [#allocation3], 0
    %9 = vsyncpa [#allocation6], 0
    %10 = vsyncpa [#allocation4], 0
    // Predicated region
    $region2: #{tpu_custom_call.1} parent=1 // pred_check
      _
    $region3: #{tpu_custom_call.1} parent=1 // pred_check_branch
      %12 = sbr.rel (0) target = $region5
    $region4: #{tpu_custom_call.1} parent=1 // pred_region
      %s14 = ssub.s32 128, 128
      %15 = vsyncadd [#allocation3], %s14
      %s17 = sshll.u32 [#allocation2], 4
      %s18 = int_to_ptr.vmem [resolvable:$true] %s17
      %20 = dma.hbm_to_vmem [thread:$0]  %s0, 128, %s18, [#allocation3]
    $region5: #{tpu_custom_call.1} parent=1 // pred_fallthru
      _
    // Predicated region
    $region6: #{tpu_custom_call.1} parent=1 // pred_check
      _
    $region7: #{tpu_custom_call.1} parent=1 // pred_check_branch
      %22 = sbr.rel (0) target = $region9
    $region8: #{tpu_custom_call.1} parent=1 // pred_region
      %s24 = ssub.s32 256, 256
      %25 = vsyncadd [#allocation6], %s24
      %s26 = sshll.u32 [#allocation5], 4
      %s27 = int_to_ptr.vmem [resolvable:$true] %s26
      %32 = dma.hbm_to_vmem [thread:$0]  %s1, 256, %s27, [#allocation6], 128, 128, 8
    $region9: #{tpu_custom_call.1} parent=1 // pred_fallthru
      _
    // Predicated region
    $region10: #{tpu_custom_call.1} parent=1 // pred_check
      _
    $region11: #{tpu_custom_call.1} parent=1 // pred_check_branch
      %34 = sbr.rel (0) target = $region13
    $region12: #{tpu_custom_call.1} parent=1 // pred_region
      _
    $region13: #{tpu_custom_call.1} parent=1 // pred_fallthru
      _
    // Predicated region
    $region14: #{tpu_custom_call.1} parent=1 // pred_check
      _
    $region15: #{tpu_custom_call.1} parent=1 // pred_check_branch
      %36 = sbr.rel (0) target = $region17
    $region16: #{tpu_custom_call.1} parent=1 // pred_region
      %37 = dma.done [#allocation3], 128
    $region17: #{tpu_custom_call.1} parent=1 // pred_fallthru
      _
    // Predicated region
    $region18: #{tpu_custom_call.1} parent=1 // pred_check
      _
    $region19: #{tpu_custom_call.1} parent=1 // pred_check_branch
      %39 = sbr.rel (0) target = $region21
    $region20: #{tpu_custom_call.1} parent=1 // pred_region
      %40 = dma.done [#allocation6], 256
    $region21: #{tpu_custom_call.1} parent=1 // pred_fallthru
      _
    %v41 = vld [vmem:[#allocation2] sm:$0xff]
    %v42 = vld [vmem:[#allocation5] sm:$0xff]
    %v43 = vld [vmem:[#allocation5 + $0x8] sm:$0x3]
    %vm44 = vcmask 80896
    %v46 = vsel %vm44, %v41, 0
    %vm48 = vcmask 1041408
    %v50 = vsel %vm48, %v43, 0
    %52 = vmatprep.subr.mxu0 0.0
    %53 = vmatpush1.msra.mxu0 0.0
    %54 = vmatprep.subr.mxu0 0.0
    %55 = vmatpush1.msra.mxu0 0.0
    %56 = vmatprep.subr.mxu0 0.0
    %57 = vmatpush1.msra.mxu0 0.0
    %58 = vmatprep.subr.mxu0 0.0
    %59 = vmatpush1.msra.mxu0 0.0
    %60 = vmatprep.subr.mxu0 0.0
    %61 = vmatpush1.msra.mxu0 0.0
    %62 = vmatprep.subr.mxu0 0.0
    %63 = vmatpush1.msra.mxu0 0.0
    %64 = vmatprep.subr.mxu0 0.0
    %65 = vmatpush1.msra.mxu0 0.0
    %66 = vmatprep.subr.mxu0 0.0
    %67 = vmatpush1.msra.mxu0 0.0
    %68 = vmatprep.subr.mxu0 0.0
    %69 = vmatpush1.msra.mxu0 0.0
    %70 = vmatprep.subr.mxu0 0.0
    %71 = vmatpush1.msra.mxu0 0.0
    %72 = vmatprep.subr.mxu0 0.0
    %73 = vmatpush1.msra.mxu0 0.0
    %74 = vmatprep.subr.mxu0 0.0
    %75 = vmatpush1.msra.mxu0 0.0
    %76 = vmatprep.subr.mxu0 0.0
    %77 = vmatpush1.msra.mxu0 0.0
    %78 = vmatprep.subr.mxu0 0.0
    %79 = vmatpush1.msra.mxu0 0.0
    %80 = vmatprep.subr.mxu0 0.0
    %81 = vmatpush1.msra.mxu0 %v50
    %82 = vmatprep.subr.mxu0 0.0
    %83 = vmatpush1.msra.mxu0 %v42
    %84 = vmatprep.subr.mxu0 0.0
    %85 = vmatpush2.msra.mxu0 0.0
    %86 = vmatprep.subr.mxu0 0.0
    %87 = vmatpush2.msra.mxu0 0.0
    %88 = vmatprep.subr.mxu0 0.0
    %89 = vmatpush2.msra.mxu0 0.0
    %90 = vmatprep.subr.mxu0 0.0
    %91 = vmatpush2.msra.mxu0 0.0
    %92 = vmatprep.subr.mxu0 0.0
    %93 = vmatpush2.msra.mxu0 0.0
    %94 = vmatprep.subr.mxu0 0.0
    %95 = vmatpush2.msra.mxu0 0.0
    %96 = vmatprep.subr.mxu0 0.0
    %97 = vmatpush2.msra.mxu0 0.0
    %98 = vmatprep.subr.mxu0 0.0
    %99 = vmatpush2.msra.mxu0 0.0
    %100 = vmatprep.subr.mxu0 0.0
    %101 = vmatpush2.msra.mxu0 0.0
    %102 = vmatprep.subr.mxu0 0.0
    %103 = vmatpush2.msra.mxu0 0.0
    %104 = vmatprep.subr.mxu0 0.0
    %105 = vmatpush2.msra.mxu0 0.0
    %106 = vmatprep.subr.mxu0 0.0
    %107 = vmatpush2.msra.mxu0 0.0
    %108 = vmatprep.subr.mxu0 0.0
    %109 = vmatpush2.msra.mxu0 0.0
    %110 = vmatprep.subr.mxu0 0.0
    %111 = vmatpush2.msra.mxu0 0.0
    %112 = vmatprep.subr.mxu0 0.0
    %113 = vmatpush2.msra.mxu0 0.0
    %114 = vmatprep.subr.mxu0 0.0
    %115 = vmatpush2.msra.mxu0 0.0
    %116 = vmatprep.mubr.f32.mxu0 0.0
    %117 = vmatmul.mubr.f32.gmra.mxu0 %v46
    %v118 = vpop.f32.mrf.mxu0
    %v119 = vadd.f32 0.0, %v118
    %v120 = vpop.f32.mrf.mxu0
    %121 = vdwg.mxu0
    %v122 = vld [vmem:[%s2] sm:$0x1]
    %v124 = vlaneseq
    %v125 = vshrl.u32 %v124, 7
    %v126 = vsub.s32 0, %v125
    %v127 = vrot.slane %v122, %v126
    %v129 = vadd.f32 %v119, %v127
    %130 = vst.msk [vmem:[#allocation7] sm:$0xff] %vm44, %v129
    // Predicated region
    $region22: #{tpu_custom_call.1} parent=1 // pred_check
      _
    $region23: #{tpu_custom_call.1} parent=1 // pred_check_branch
      %132 = sbr.rel (0) target = $region25
    $region24: #{tpu_custom_call.1} parent=1 // pred_region
      %s134 = ssub.s32 128, 128
      %135 = vsyncadd [#allocation4], %s134
      %s137 = sshll.u32 [#allocation7], 4
      %s138 = int_to_ptr.vmem [resolvable:$true] %s137
      %140 = dma.vmem_to_hbm [thread:$0]  %s138, 128, %s3, [#allocation4]
    $region25: #{tpu_custom_call.1} parent=1 // pred_fallthru
      _
    // Predicated region
    $region26: #{tpu_custom_call.1} parent=1 // pred_check
      _
    $region27: #{tpu_custom_call.1} parent=1 // pred_check_branch
      %142 = sbr.rel (0) target = $region29
    $region28: #{tpu_custom_call.1} parent=1 // pred_region
      %143 = dma.done [#allocation4], 128
    $region29: #{tpu_custom_call.1} parent=1 // pred_fallthru
      _
    %144 = vsyncpa [#allocation3], 1
    %145 = vsyncpa [#allocation6], 1
    %146 = vsyncpa [#allocation4], 1

</llo_original>
